<compile_context>
chip_gen: v6e
topology: v6e:2x2x1
jax: 0.10.0
libtpu: 0.0.40
codegen_flags: <defaults>
</compile_context>

<pallas_src>
import functools

import jax
import jax.numpy as jnp
from jax.experimental import pallas as pl
from jax.experimental.pallas import tpu as pltpu


def _round_up(x: int, m: int) -> int:
    return (x + m - 1) // m * m


def _features_linear_kernel(idx_ref, emb_ref, bias_ref, out_ref, acc_ref,
                            *, v_tile, use_mxu):
    """One (batch-tile, vocab-tile) grid step.

    idx_ref : (F, B_t)  int32   pre-offset indices, batch on lanes
    emb_ref : (D, V_t)  f32     (MXU path, transposed)  or  (V_t, D) (VPU path)
    bias_ref: (D, 1)    f32
    out_ref : (D, B_t)  f32     transposed output (batch on lanes -> lane-dense)
    acc_ref : (D, B_t)  f32     VMEM accumulator, persists across the V reduction
    """
    vi = pl.program_id(1)

    @pl.when(vi == 0)
    def _init():
        acc_ref[...] = jnp.zeros_like(acc_ref)

    idx = idx_ref[...]                                   # (F, B_t) int32
    num_fields, b_tile = idx.shape
    v_start = vi * v_tile

    # counts_t[v, b] = #{ f : idx[f, b] == v_start + v }
    # Accumulate the per-field boolean compares in int32; cast once afterwards.
    iota_v = jax.lax.broadcasted_iota(jnp.int32, (v_tile, b_tile), 0) + v_start
    counts = (idx[0:1, :] == iota_v).astype(jnp.int32)
    for f in range(1, num_fields):
        counts = counts + (idx[f:f + 1, :] == iota_v).astype(jnp.int32)

    if use_mxu:
        # D is a multiple of 128: bf16 MXU matmul, f32 accumulation.
        # counts are exact small integers in bf16; emb loses bf16 precision
        # (documented trade-off for 2x+ MXU throughput on v6e/v7x).
        contrib = jnp.dot(emb_ref[...].astype(jnp.bfloat16),
                          counts.astype(jnp.bfloat16),
                          preferred_element_type=jnp.float32)        # (D, B_t)
    else:
        # Small D (FM-linear D == 1): stay off the MXU.  VPU multiply with the
        # broadcast emb column, then a sublane (cross-V) reduction.
        counts_f = counts.astype(jnp.float32)
        d_out = emb_ref.shape[1]
        rows = [jnp.sum(counts_f * emb_ref[:, d:d + 1], axis=0, keepdims=True)
                for d in range(d_out)]                               # (1, B_t) each
        contrib = rows[0] if d_out == 1 else jnp.concatenate(rows, axis=0)

    acc_ref[...] = acc_ref[...] + contrib

    @pl.when(vi == pl.num_programs(1) - 1)
    def _finalize():
        # Single lane-dense store + bias add only in the epilogue.
        out_ref[...] = (acc_ref[...] + bias_ref[...]).astype(out_ref.dtype)


def features_linear(x, offsets, emb, bias, *, b_tile=256, v_tile=1024):
    """x: (B, F) int indices; offsets: (F,) int; emb: (V, D) f32; bias: (D,) f32.

    Returns (B, D) f32:  sum_f emb[x[:, f] + offsets[f], :] + bias.
    """
    B, F = x.shape
    V, D = emb.shape

    # Hoist the per-field offsets add out of the kernel: pre-offset once on host.
    # (Assumes sum(field_dims) fits in int32.)
    idx = x.astype(jnp.int32) + offsets.astype(jnp.int32)[None, :]   # (B, F)

    # Tile sizes: batch lives on lanes, vocab tiles feed both paths -> keep both
    # tile sizes multiples of 128 and no larger than the padded extents.
    b_tile = _round_up(min(b_tile, _round_up(B, 128)), 128)
    v_tile = _round_up(min(v_tile, _round_up(V, 128)), 128)
    B_pad = _round_up(B, b_tile)
    V_pad = _round_up(V, v_tile)

    # Pad + transpose so batch is the fast (lane) axis.  Padded batch columns
    # read index 0 and are sliced off after the call; padded vocab rows are
    # never matched by any valid index.
    idx_t = jnp.pad(idx, ((0, B_pad - B), (0, 0))).T                 # (F, B_pad)
    bias2 = bias.reshape(D, 1).astype(jnp.float32)                   # (D, 1)

    use_mxu = (D % 128 == 0)
    if use_mxu:
        emb_in = jnp.pad(emb.astype(jnp.float32), ((0, V_pad - V), (0, 0))).T  # (D, V_pad)
        emb_spec = pl.BlockSpec((D, v_tile), lambda bi, vi: (0, vi))
    else:
        emb_in = jnp.pad(emb.astype(jnp.float32), ((0, V_pad - V), (0, 0)))    # (V_pad, D)
        emb_spec = pl.BlockSpec((v_tile, D), lambda bi, vi: (vi, 0))

    grid = (B_pad // b_tile, V_pad // v_tile)
    kernel = functools.partial(_features_linear_kernel,
                               v_tile=v_tile, use_mxu=use_mxu)

    out_t = pl.pallas_call(
        kernel,
        out_shape=jax.ShapeDtypeStruct((D, B_pad), jnp.float32),
        grid_spec=pltpu.PrefetchScalarGridSpec(
            num_scalar_prefetch=0,
            grid=grid,
            in_specs=[
                pl.BlockSpec((F, b_tile), lambda bi, vi: (0, bi)),   # indices
                emb_spec,                                            # emb tile
                pl.BlockSpec((D, 1), lambda bi, vi: (0, 0)),         # bias
            ],
            out_specs=pl.BlockSpec((D, b_tile), lambda bi, vi: (0, bi)),
            scratch_shapes=[pltpu.VMEM((D, b_tile), jnp.float32)],   # accumulator
        ),
        compiler_params=pltpu.CompilerParams(
            dimension_semantics=("parallel", "arbitrary"),
            vmem_limit_bytes=32 * 1024 * 1024,   # safe on v5e/v6e/v7x
        ),
    )(idx_t, emb_in, bias2)

    return out_t[:, :B].T                                            # (B, D)


def _offsets_from_field_dims(field_dims):
    fd = jnp.asarray(field_dims, jnp.int32)
    return jnp.concatenate([jnp.zeros((1,), jnp.int32), jnp.cumsum(fd)[:-1]])


if __name__ == "__main__":
    key = jax.random.PRNGKey(0)
    k_emb1, k_b1, k_x1, k_emb2, k_b2, k_x2 = jax.random.split(key, 6)

    # ---- Test 1: FM-linear case, output_dim = 1 (VPU path, multi-tile grid) ----
    field_dims1 = (50, 80, 100, 70)          # V = 300 -> 3 vocab tiles of 128
    B1, D1 = 200, 1                          # -> 2 batch tiles of 128
    F1, V1 = len(field_dims1), int(sum(field_dims1))

    emb1 = jax.random.normal(k_emb1, (V1, D1), dtype=jnp.float32)
    bias1 = 0.1 * jax.random.normal(k_b1, (D1,), dtype=jnp.float32)
    offs1 = _offsets_from_field_dims(field_dims1)
    kx1 = jax.random.split(k_x1, F1)
    x1 = jnp.concatenate(
        [jax.random.randint(kx1[f], (B1, 1), 0, field_dims1[f], dtype=jnp.int32)
         for f in range(F1)], axis=1)

    out1 = jax.block_until_ready(
        features_linear(x1, offs1, emb1, bias1, b_tile=128, v_tile=128))
    ref1 = jnp.take(emb1, x1 + offs1[None, :], axis=0).sum(axis=1) + bias1[None, :]
    assert out1.shape == (B1, D1)
    assert jnp.allclose(out1, ref1, atol=1e-4, rtol=1e-4), \
        float(jnp.max(jnp.abs(out1 - ref1)))

    # ---- Test 2: wide output_dim = 128 (bf16 MXU path, multi-tile reduction) ----
    field_dims2 = (40, 60, 30, 70, 60)       # V = 260 -> 3 vocab tiles of 128
    B2, D2 = 96, 128
    F2, V2 = len(field_dims2), int(sum(field_dims2))

    emb2 = jax.random.normal(k_emb2, (V2, D2), dtype=jnp.float32)
    bias2 = 0.1 * jax.random.normal(k_b2, (D2,), dtype=jnp.float32)
    offs2 = _offsets_from_field_dims(field_dims2)
    kx2 = jax.random.split(k_x2, F2)
    x2 = jnp.concatenate(
        [jax.random.randint(kx2[f], (B2, 1), 0, field_dims2[f], dtype=jnp.int32)
         for f in range(F2)], axis=1)

    out2 = jax.block_until_ready(
        features_linear(x2, offs2, emb2, bias2, b_tile=128, v_tile=128))
    # Reference uses bf16-rounded weights (MXU path feeds bf16 operands, f32 acc).
    emb2_bf = emb2.astype(jnp.bfloat16).astype(jnp.float32)
    ref2 = jnp.take(emb2_bf, x2 + offs2[None, :], axis=0).sum(axis=1) + bias2[None, :]
    assert out2.shape == (B2, D2)
    assert jnp.allclose(out2, ref2, atol=2e-3, rtol=2e-3), \
        float(jnp.max(jnp.abs(out2 - ref2)))

    print("KERNEL_OK")
</pallas_src>

<mosaic_0001>
module attributes {stable_mosaic.version = 11 : i64} {
  func.func @_features_linear_kernel(%arg0: i32, %arg1: i32, %arg2: memref<4x128xi32, #tpu.memory_space<vmem>>, %arg3: memref<128x1xf32, #tpu.memory_space<vmem>>, %arg4: memref<1x1xf32, #tpu.memory_space<vmem>>, %arg5: memref<1x128xf32, #tpu.memory_space<vmem>>, %arg6: memref<1x128xf32, #tpu.memory_space<vmem>>) attributes {dimension_semantics = [#tpu.dimension_semantics<parallel>, #tpu.dimension_semantics<arbitrary>], iteration_bounds = array<i64: 2, 3>, scalar_prefetch = 0 : i64, scratch_operands = 1 : i64, tpu.core_type = #tpu.core_type<tc>, window_params = [{transform_indices = @transform_0, window_bounds = array<i64: 4, 128>}, {transform_indices = @transform_1, window_bounds = array<i64: 128, 1>}, {pipeline_mode = #tpu.pipeline_mode<synchronous>, transform_indices = @transform_2, window_bounds = array<i64: 1, 1>}, {transform_indices = @transform_3, window_bounds = array<i64: 1, 128>}]} {
    %c0_i32 = arith.constant 0 : i32
    %0 = arith.cmpi eq, %arg1, %c0_i32 : i32
    %1 = arith.extui %0 : i1 to i32
    %c0_i32_0 = arith.constant 0 : i32
    %2 = arith.cmpi ne, %1, %c0_i32_0 : i32
    scf.if %2 {
      %cst_9 = arith.constant 0.000000e+00 : f32
      %39 = vector.broadcast %cst_9 : f32 to vector<1x128xf32>
      %c0_10 = arith.constant 0 : index
      %c0_11 = arith.constant 0 : index
      %40 = vector.load %arg6[%c0_10, %c0_11] : memref<1x128xf32, #tpu.memory_space<vmem>>, vector<1x128xf32>
      tpu.vector_store %arg6[%c0_10, %c0_11], %39 {strides = array<i32>} : memref<1x128xf32, #tpu.memory_space<vmem>>, vector<1x128xf32>,
    } else {
    }
    %c0 = arith.constant 0 : index
    %c0_1 = arith.constant 0 : index
    %3 = vector.load %arg2[%c0, %c0_1] : memref<4x128xi32, #tpu.memory_space<vmem>>, vector<4x128xi32>
    %c128_i32 = arith.constant 128 : i32
    %4 = arith.muli %arg1, %c128_i32 : i32
    %5 = tpu.iota {dimensions = array<i32: 0>} : vector<128x128xi32>
    %6 = vector.broadcast %4 : i32 to vector<128x128xi32>
    %7 = arith.addi %5, %6 : vector<128x128xi32>
    %8 = vector.extract_strided_slice %3 {offsets = [0, 0], sizes = [1, 128], strides = [1, 1]} : vector<4x128xi32> to vector<1x128xi32>
    %9 = vector.broadcast %8 : vector<1x128xi32> to vector<128x128xi32>
    %10 = arith.cmpi eq, %9, %7 : vector<128x128xi32>
    %11 = arith.extui %10 : vector<128x128xi1> to vector<128x128xi32>
    %12 = vector.extract_strided_slice %3 {offsets = [1, 0], sizes = [1, 128], strides = [1, 1]} : vector<4x128xi32> to vector<1x128xi32>
    %13 = vector.broadcast %12 : vector<1x128xi32> to vector<128x128xi32>
    %14 = arith.cmpi eq, %13, %7 : vector<128x128xi32>
    %15 = arith.extui %14 : vector<128x128xi1> to vector<128x128xi32>
    %16 = arith.addi %11, %15 : vector<128x128xi32>
    %17 = vector.extract_strided_slice %3 {offsets = [2, 0], sizes = [1, 128], strides = [1, 1]} : vector<4x128xi32> to vector<1x128xi32>
    %18 = vector.broadcast %17 : vector<1x128xi32> to vector<128x128xi32>
    %19 = arith.cmpi eq, %18, %7 : vector<128x128xi32>
    %20 = arith.extui %19 : vector<128x128xi1> to vector<128x128xi32>
    %21 = arith.addi %16, %20 : vector<128x128xi32>
    %22 = vector.extract_strided_slice %3 {offsets = [3, 0], sizes = [1, 128], strides = [1, 1]} : vector<4x128xi32> to vector<1x128xi32>
    %23 = vector.broadcast %22 : vector<1x128xi32> to vector<128x128xi32>
    %24 = arith.cmpi eq, %23, %7 : vector<128x128xi32>
    %25 = arith.extui %24 : vector<128x128xi1> to vector<128x128xi32>
    %26 = arith.addi %21, %25 : vector<128x128xi32>
    %27 = arith.sitofp %26 : vector<128x128xi32> to vector<128x128xf32>
    %c0_2 = arith.constant 0 : index
    %c0_3 = arith.constant 0 : index
    %28 = vector.load %arg3[%c0_2, %c0_3] : memref<128x1xf32, #tpu.memory_space<vmem>>, vector<128x1xf32>
    %29 = vector.broadcast %28 : vector<128x1xf32> to vector<128x128xf32>
    %30 = arith.mulf %27, %29 : vector<128x128xf32>
    %cst = arith.constant dense<0.000000e+00> : vector<128xf32>
    %31 = vector.multi_reduction <add>, %30, %cst [0] : vector<128x128xf32> to vector<128xf32>
    %32 = vector.shape_cast %31 : vector<128xf32> to vector<1x128xf32>
    %c0_4 = arith.constant 0 : index
    %c0_5 = arith.constant 0 : index
    %33 = vector.load %arg6[%c0_4, %c0_5] : memref<1x128xf32, #tpu.memory_space<vmem>>, vector<1x128xf32>
    %34 = arith.addf %33, %32 : vector<1x128xf32>
    %c0_6 = arith.constant 0 : index
    %c0_7 = arith.constant 0 : index
    %35 = vector.load %arg6[%c0_6, %c0_7] : memref<1x128xf32, #tpu.memory_space<vmem>>, vector<1x128xf32>
    tpu.vector_store %arg6[%c0_6, %c0_7], %34 {strides = array<i32>} : memref<1x128xf32, #tpu.memory_space<vmem>>, vector<1x128xf32>,
    %c2_i32 = arith.constant 2 : i32
    %36 = arith.cmpi eq, %arg1, %c2_i32 : i32
    %37 = arith.extui %36 : i1 to i32
    %c0_i32_8 = arith.constant 0 : i32
    %38 = arith.cmpi ne, %37, %c0_i32_8 : i32
    scf.if %38 {
      %c0_9 = arith.constant 0 : index
      %c0_10 = arith.constant 0 : index
      %39 = vector.load %arg6[%c0_9, %c0_10] : memref<1x128xf32, #tpu.memory_space<vmem>>, vector<1x128xf32>
      %c0_11 = arith.constant 0 : index
      %c0_12 = arith.constant 0 : index
      %40 = vector.load %arg4[%c0_11, %c0_12] : memref<1x1xf32, #tpu.memory_space<vmem>>, vector<1x1xf32>
      %41 = vector.broadcast %40 : vector<1x1xf32> to vector<1x128xf32>
      %42 = arith.addf %39, %41 : vector<1x128xf32>
      %c0_13 = arith.constant 0 : index
      %c0_14 = arith.constant 0 : index
      %43 = vector.load %arg5[%c0_13, %c0_14] : memref<1x128xf32, #tpu.memory_space<vmem>>, vector<1x128xf32>
      tpu.vector_store %arg5[%c0_13, %c0_14], %42 {strides = array<i32>} : memref<1x128xf32, #tpu.memory_space<vmem>>, vector<1x128xf32>,
    } else {
    }
    return
  }
  func.func @transform_0(%arg0: i32, %arg1: i32) -> (i32, i32) {
    %c0_i32 = arith.constant 0 : i32
    %c0_i32_0 = arith.constant 0 : i32
    return %c0_i32, %arg0 : i32, i32
  }
  func.func @transform_1(%arg0: i32, %arg1: i32) -> (i32, i32) {
    %c0_i32 = arith.constant 0 : i32
    %c0_i32_0 = arith.constant 0 : i32
    return %arg1, %c0_i32 : i32, i32
  }
  func.func @transform_2(%arg0: i32, %arg1: i32) -> (i32, i32) {
    %c0_i32 = arith.constant 0 : i32
    %c0_i32_0 = arith.constant 0 : i32
    %c0_i32_1 = arith.constant 0 : i32
    return %c0_i32, %c0_i32_0 : i32, i32
  }
  func.func @transform_3(%arg0: i32, %arg1: i32) -> (i32, i32) {
    %c0_i32 = arith.constant 0 : i32
    %c0_i32_0 = arith.constant 0 : i32
    return %c0_i32, %arg0 : i32, i32
  }
}

</mosaic_0001>

<llo_original>
// kernel: tpu_custom_call.1
$region0: #{tpu_custom_call.1}
  #allocation0 [shape = 'u32[]', space=smem, size = 0x4, offset = 0x4, fixed_abs, tag = 'smem constant byte address 0x4 - core index']
  #allocation1 [shape = 'u32[144,128]{1,0:T(1,128)}', space=vmem, size = 0x12000, scoped, tag = 'internal scratch']
  #allocation2 [shape = 'f32[1,128]{1,0:T(1,128)}', space=vmem, size = 0x200, scoped, tag = 'scratch operand']
  #allocation3 [shape = 'f32[1,1]{1,0:T(1,128)S(1)}', space=vmem, size = 0x200, scoped, tag = 'scoped memory for tpu_custom_call.1']
  %s0 = inlined_call_operand.vmem [shape: s32[4,256], index: 0, kind: input, shape index: {}]
  %s1 = inlined_call_operand.vmem [shape: f32[384,1], index: 1, kind: input, shape index: {}]
  %s2 = inlined_call_operand.<no memory space> [shape: f32[1,1], index: 2, kind: input, shape index: {}]
  %s3 = inlined_call_operand.hbm [shape: f32[1,256], index: 3, kind: output, shape index: {}]
  %s4 = sld [smem:[#allocation0]]
  $region53: #{tpu_custom_call.1} parent=0
    _
  %s6 = ssub.s32 1, %s4
  %s7 = scalar_select 0, %s6, %s4
  %v8 = vstv %s2
  %9 = vst [vmem:[#allocation3] sm:$0x1] %v8
  $region1: #{tpu_custom_call.1} parent=0
    #allocation4 [shape = 'u8[1024]{0}', space=vmem, size = 0x400, scoped, tag = 'output window, operand 0']
    #allocation5 [shape = 's32[2]{0}', space=sflag, size = 0x8, scoped, tag = 'scoped memory for tpu_custom_call.1']
    %10 = vsyncpa [#allocation5], 0
    %s11 = scalar_lea.sflag [#allocation5], 1
    %12 = vsyncpa %s11, 0
    loop: start=0, step=1, limit=8
    $region2: #{tpu_custom_call.1} parent=1 // loop_pre_header
      _
    $region3: #{tpu_custom_call.1} parent=1 // loop_header
      %s14 = sphi 0, %s18
      %p15 = scmp.ge.s32.totalorder %s14, 8
      %s21 = sphi 0, %s33
      %s22 = sphi 0, %s29
      %s23 = sphi 0, %s21
      %s24 = sphi 0, %s22
      %s25 = sphi 0, %s23
      %s26 = sphi 0, %s24
      %s36 = sphi 0, %s38
      %s39 = sphi 0, %s36
      %s40 = sphi 0, %s39
      %s56 = sphi 0, %s40
      %s62 = sphi 0, %s64
      %s65 = sphi 0, %s62
      %s66 = sphi 0, %s65
      %s82 = sphi 0, %s66
      %s86 = sphi 0, %s86
      %s88 = sphi 0, %s86
      %s89 = sphi 0, %s88
      %s103 = sphi 0, %s89
      %s109 = sphi 0, %s111
      %s112 = sphi 0, %s109
      %s113 = sphi 0, %s112
      %s129 = sphi 0, %s113
    $region4: #{tpu_custom_call.1} parent=1 // loop_header_branch
      %17 = sbr.rel (%p15) target = $region8
    $region5: #{tpu_custom_call.1} parent=1 // loop_body
      %s19 = ssub.s32 %s14, 1
      %s20 = ssub.s32 %s14, 2
      %s27 = sadd.s32 1, %s22
      %p28 = scmp.ge.s32.totalorder %s27, 3
      %s29 = scalar_select %p28, 0, %s27
      %s30 = sadd.s32 1, %s21
      %s31 = scalar_select %p28, %s30, %s21
      %p32 = scmp.ge.s32.totalorder %s31, 2
      %s33 = scalar_select %p32, 0, %s31
      %s34 = ssub.s32 %s21, %s33
      %p35 = scmp.eq.s32.totalorder %s34, 0
      %s37 = sadd.s32 %s36, 1
      %s38 = scalar_select %p35, %s36, %s37
      %p41 = pneg %p35
      %p42 = scmp.eq.s32.totalorder %s14, 5
      %p43 = por %p41, %p42
      %p44 = scmp.ne.s32.totalorder %s36, %s39
      %p45 = scmp.eq.s32.totalorder %s14, 0
      %p46 = por %p44, %p45
      %p47 = scmp.ne.s32.totalorder %s36, %s39
      %p48 = scmp.eq.s32.totalorder %s19, 5
      %p49 = por %p47, %p48
      %p50 = scmp.ne.s32.totalorder %s39, %s40
      %p51 = scmp.eq.s32.totalorder %s19, 0
      %p52 = por %p50, %p51
      %p53 = scmp.ne.s32.totalorder %s39, %s40
      %p54 = scmp.eq.s32.totalorder %s20, 5
      %p55 = por %p53, %p54
      %p57 = scmp.ne.s32.totalorder %s40, %s56
      %p58 = scmp.eq.s32.totalorder %s20, 0
      %p59 = por %p57, %p58
      %s60 = ssub.s32 %s22, %s29
      %p61 = scmp.eq.s32.totalorder %s60, 0
      %s63 = sadd.s32 %s62, 1
      %s64 = scalar_select %p61, %s62, %s63
      %p67 = pneg %p61
      %p68 = scmp.eq.s32.totalorder %s14, 5
      %p69 = por %p67, %p68
      %p70 = scmp.ne.s32.totalorder %s62, %s65
      %p71 = scmp.eq.s32.totalorder %s14, 0
      %p72 = por %p70, %p71
      %p73 = scmp.ne.s32.totalorder %s62, %s65
      %p74 = scmp.eq.s32.totalorder %s19, 5
      %p75 = por %p73, %p74
      %p76 = scmp.ne.s32.totalorder %s65, %s66
      %p77 = scmp.eq.s32.totalorder %s19, 0
      %p78 = por %p76, %p77
      %p79 = scmp.ne.s32.totalorder %s65, %s66
      %p80 = scmp.eq.s32.totalorder %s20, 5
      %p81 = por %p79, %p80
      %p83 = scmp.ne.s32.totalorder %s66, %s82
      %p84 = scmp.eq.s32.totalorder %s20, 0
      %p85 = por %p83, %p84
      %s87 = sadd.s32 %s86, 1
      %p90 = scmp.eq.s32.totalorder %s14, 5
      %p91 = scmp.ne.s32.totalorder %s86, %s88
      %p92 = scmp.eq.s32.totalorder %s14, 0
      %p93 = por %p91, %p92
      %p94 = scmp.ne.s32.totalorder %s86, %s88
      %p95 = scmp.eq.s32.totalorder %s19, 5
      %p96 = por %p94, %p95
      %p97 = scmp.ne.s32.totalorder %s88, %s89
      %p98 = scmp.eq.s32.totalorder %s19, 0
      %p99 = por %p97, %p98
      %p100 = scmp.ne.s32.totalorder %s88, %s89
      %p101 = scmp.eq.s32.totalorder %s20, 5
      %p102 = por %p100, %p101
      %p104 = scmp.ne.s32.totalorder %s89, %s103
      %p105 = scmp.eq.s32.totalorder %s20, 0
      %p106 = por %p104, %p105
      %s107 = ssub.s32 %s21, %s33
      %p108 = scmp.eq.s32.totalorder %s107, 0
      %s110 = sadd.s32 %s109, 1
      %s111 = scalar_select %p108, %s109, %s110
      %p114 = pneg %p108
      %p115 = scmp.eq.s32.totalorder %s14, 5
      %p116 = por %p114, %p115
      %p117 = scmp.ne.s32.totalorder %s109, %s112
      %p118 = scmp.eq.s32.totalorder %s14, 0
      %p119 = por %p117, %p118
      %p120 = scmp.ne.s32.totalorder %s109, %s112
      %p121 = scmp.eq.s32.totalorder %s19, 5
      %p122 = por %p120, %p121
      %p123 = scmp.ne.s32.totalorder %s112, %s113
      %p124 = scmp.eq.s32.totalorder %s19, 0
      %p125 = por %p123, %p124
      %p126 = scmp.ne.s32.totalorder %s112, %s113
      %p127 = scmp.eq.s32.totalorder %s20, 5
      %p128 = por %p126, %p127
      %p130 = scmp.ne.s32.totalorder %s113, %s129
      %p131 = scmp.eq.s32.totalorder %s20, 0
      %p132 = por %p130, %p131
      %p133 = scmp.le.s32.totalorder 1, %s14
      %p134 = scmp.lt.s32.totalorder %s14, 7
      %p135 = pnand %p133, %p134
      %p136 = pneg %p135
      // Predicated region
      $region9: #{tpu_custom_call.1} parent=5 // pred_check
        _
      $region10: #{tpu_custom_call.1} parent=5 // pred_check_branch
        %138 = sbr.rel (%p135) target = $region12
      $region11: #{tpu_custom_call.1} parent=5 // pred_region
        %s139 = ssub.s32 %s14, 1
        // Predicated region
        $region13: #{tpu_custom_call.1} parent=11 // pred_check
          %p140 = pneg %p99
        $region14: #{tpu_custom_call.1} parent=11 // pred_check_branch
          %142 = sbr.rel (%p140) target = $region16
        $region15: #{tpu_custom_call.1} parent=11 // pred_region
          _
        $region16: #{tpu_custom_call.1} parent=11 // pred_fallthru
          _
      $region12: #{tpu_custom_call.1} parent=5 // pred_fallthru
        _
      %p143 = scmp.lt.s32.totalorder %s14, 6
      // Predicated region
      $region17: #{tpu_custom_call.1} parent=5 // pred_check
        %p144 = pneg %p143
      $region18: #{tpu_custom_call.1} parent=5 // pred_check_branch
        %146 = sbr.rel (%p144) target = $region20
      $region19: #{tpu_custom_call.1} parent=5 // pred_region
        // Predicated region
        $region21: #{tpu_custom_call.1} parent=19 // pred_check
          %p147 = pneg %p46
        $region22: #{tpu_custom_call.1} parent=19 // pred_check_branch
          %149 = sbr.rel (%p147) target = $region24
        $region23: #{tpu_custom_call.1} parent=19 // pred_region
          %p150 = scmp.lt.s32.totalorder %s21, 1
          %s151 = scalar_select %p150, %s21, 1
          %s152 = smul.addr %s151, 4
          %s153 = scalar_lea.vmem %s0, %s152
        $region24: #{tpu_custom_call.1} parent=19 // pred_fallthru
          _
        // Predicated region
        $region25: #{tpu_custom_call.1} parent=19 // pred_check
          %p154 = pneg %p72
        $region26: #{tpu_custom_call.1} parent=19 // pred_check_branch
          %156 = sbr.rel (%p154) target = $region28
        $region27: #{tpu_custom_call.1} parent=19 // pred_region
          %s157 = smul.u32 16, %s22
          %p158 = scmp.lt.s32.totalorder %s157, 47
          %s159 = scalar_select %p158, %s157, 47
          %s160 = smul.addr %s159, 8
          %s161 = scalar_lea.vmem %s1, %s160
          %s162 = smul.u32 16, %s22
        $region28: #{tpu_custom_call.1} parent=19 // pred_fallthru
          _
      $region20: #{tpu_custom_call.1} parent=5 // pred_fallthru
        _
      %p163 = scmp.le.s32.totalorder 1, %s14
      %p164 = scmp.lt.s32.totalorder %s14, 7
      %p165 = pnand %p163, %p164
      %p166 = pneg %p165
      // Predicated region
      $region29: #{tpu_custom_call.1} parent=5 // pred_check
        _
      $region30: #{tpu_custom_call.1} parent=5 // pred_check_branch
        %168 = sbr.rel (%p165) target = $region32
      $region31: #{tpu_custom_call.1} parent=5 // pred_region
        %s169 = ssub.s32 %s14, 1
        %p170 = scmp.lt.s32.totalorder %s23, 1
        %s171 = scalar_select %p170, %s23, 1
        %s172 = smul.addr %s171, 4
        %s173 = scalar_lea.vmem %s0, %s172
        %p174 = pneg %p52
        %p175 = pneg %p49
        %s176 = smul.u32 16, %s24
        %p177 = scmp.lt.s32.totalorder %s176, 47
        %s178 = scalar_select %p177, %s176, 47
        %s179 = smul.addr %s178, 8
        %s180 = scalar_lea.vmem %s1, %s179
        %p181 = pneg %p78
        %p182 = pneg %p75
        %p183 = pneg %p99
        %p184 = pneg %p96
        %p185 = pneg %p125
        %p186 = pneg %p122
        %s187 = sand.u32 %s112, 1
        %s188 = scalar_lea.sflag [#allocation5], %s187
        %s189 = sand.u32 %s112, 1
        %s190 = scalar_lea.vmem [#allocation4], %s189
        %p191 = scmp.lt.s32.totalorder %s23, 1
        %s192 = scalar_select %p191, %s23, 1
        %s193 = smul.addr %s192, 4
        %s194 = scalar_lea.vmem %s0, %s193
        %s195 = smul.u32 16, %s24
        %p196 = scmp.lt.s32.totalorder %s195, 47
        %s197 = scalar_select %p196, %s195, 47
        %s198 = smul.addr %s197, 8
        %s199 = scalar_lea.vmem %s1, %s198
        %s200 = smul.u32 16, %s24
        %p201 = scmp.eq.s32.totalorder %s24, 0
        // Predicated region
        $region33: #{tpu_custom_call.1} parent=31 // pred_check
          %p202 = pneg %p201
        $region34: #{tpu_custom_call.1} parent=31 // pred_check_branch
          %204 = sbr.rel (%p202) target = $region36
        $region35: #{tpu_custom_call.1} parent=31 // pred_region
          %205 = vst [vmem:[#allocation2] sm:$0x1] 0.0
        $region36: #{tpu_custom_call.1} parent=31 // pred_fallthru
          _
        %v206 = vld [vmem:[%s194] sm:$0xf]
        %s207 = smul.u32 %s24, 128
        %v208 = vlaneseq
        %v209 = vshrl.u32 %v208, 7
        %v210 = vadd.s32 %v209, 8
        %v211 = vadd.s32 %v209, 16
        %v212 = vadd.s32 %v209, 24
        %v213 = vadd.s32 %v209, 32
        %v214 = vadd.s32 %v209, 40
        %v215 = vadd.s32 %v209, 48
        %v216 = vadd.s32 %v209, 56
        %v217 = vadd.s32 %v209, 64
        %v218 = vadd.s32 %v209, 72
        %v219 = vadd.s32 %v209, 80
        %v220 = vadd.s32 %v209, 88
        %v221 = vadd.s32 %v209, 96
        %v222 = vadd.s32 %v209, 104
        %v223 = vadd.s32 %v209, 112
        %v224 = vadd.s32 %v209, 120
        %v225 = vstv %s207
        %v226 = vadd.s32 %v209, %v225
        %v227 = vadd.s32 %v210, %v225
        %v228 = vadd.s32 %v211, %v225
        %v229 = vadd.s32 %v212, %v225
        %v230 = vadd.s32 %v213, %v225
        %v231 = vadd.s32 %v214, %v225
        %v232 = vadd.s32 %v215, %v225
        %v233 = vadd.s32 %v216, %v225
        %v234 = vadd.s32 %v217, %v225
        %v235 = vadd.s32 %v218, %v225
        %v236 = vadd.s32 %v219, %v225
        %v237 = vadd.s32 %v220, %v225
        %v238 = vadd.s32 %v221, %v225
        %v239 = vadd.s32 %v222, %v225
        %v240 = vadd.s32 %v223, %v225
        %v241 = vadd.s32 %v224, %v225
        %v242 = vlaneseq
        %v243 = vshrl.u32 %v242, 7
        %v244 = vsub.s32 0, %v243
        %v245 = vrot.slane %v206, %v244
        %vm246 = vcmp.eq.s32.totalorder %v245, %v226
        %vm247 = vcmp.eq.s32.totalorder %v245, %v227
        %vm248 = vcmp.eq.s32.totalorder %v245, %v228
        %vm249 = vcmp.eq.s32.totalorder %v245, %v229
        %vm250 = vcmp.eq.s32.totalorder %v245, %v230
        %vm251 = vcmp.eq.s32.totalorder %v245, %v231
        %vm252 = vcmp.eq.s32.totalorder %v245, %v232
        %vm253 = vcmp.eq.s32.totalorder %v245, %v233
        %vm254 = vcmp.eq.s32.totalorder %v245, %v234
        %vm255 = vcmp.eq.s32.totalorder %v245, %v235
        %vm256 = vcmp.eq.s32.totalorder %v245, %v236
        %vm257 = vcmp.eq.s32.totalorder %v245, %v237
        %vm258 = vcmp.eq.s32.totalorder %v245, %v238
        %vm259 = vcmp.eq.s32.totalorder %v245, %v239
        %vm260 = vcmp.eq.s32.totalorder %v245, %v240
        %vm261 = vcmp.eq.s32.totalorder %v245, %v241
        %v262 = vsel %vm246, 1, 0
        %v263 = vsel %vm247, 1, 0
        %v264 = vsel %vm248, 1, 0
        %v265 = vsel %vm249, 1, 0
        %v266 = vsel %vm250, 1, 0
        %v267 = vsel %vm251, 1, 0
        %v268 = vsel %vm252, 1, 0
        %v269 = vsel %vm253, 1, 0
        %v270 = vsel %vm254, 1, 0
        %v271 = vsel %vm255, 1, 0
        %v272 = vsel %vm256, 1, 0
        %v273 = vsel %vm257, 1, 0
        %v274 = vsel %vm258, 1, 0
        %v275 = vsel %vm259, 1, 0
        %v276 = vsel %vm260, 1, 0
        %v277 = vsel %vm261, 1, 0
        %v278 = vlaneseq
        %v279 = vshrl.u32 %v278, 7
        %v280 = vsub.s32 1, %v279
        %v281 = vrot.slane %v206, %v280
        %vm282 = vcmp.eq.s32.totalorder %v281, %v226
        %vm283 = vcmp.eq.s32.totalorder %v281, %v227
        %vm284 = vcmp.eq.s32.totalorder %v281, %v228
        %vm285 = vcmp.eq.s32.totalorder %v281, %v229
        %vm286 = vcmp.eq.s32.totalorder %v281, %v230
        %vm287 = vcmp.eq.s32.totalorder %v281, %v231
        %vm288 = vcmp.eq.s32.totalorder %v281, %v232
        %vm289 = vcmp.eq.s32.totalorder %v281, %v233
        %vm290 = vcmp.eq.s32.totalorder %v281, %v234
        %vm291 = vcmp.eq.s32.totalorder %v281, %v235
        %vm292 = vcmp.eq.s32.totalorder %v281, %v236
        %vm293 = vcmp.eq.s32.totalorder %v281, %v237
        %vm294 = vcmp.eq.s32.totalorder %v281, %v238
        %vm295 = vcmp.eq.s32.totalorder %v281, %v239
        %vm296 = vcmp.eq.s32.totalorder %v281, %v240
        %vm297 = vcmp.eq.s32.totalorder %v281, %v241
        %v298 = vsel %vm282, 1, 0
        %v299 = vsel %vm283, 1, 0
        %v300 = vsel %vm284, 1, 0
        %v301 = vsel %vm285, 1, 0
        %v302 = vsel %vm286, 1, 0
        %v303 = vsel %vm287, 1, 0
        %v304 = vsel %vm288, 1, 0
        %v305 = vsel %vm289, 1, 0
        %v306 = vsel %vm290, 1, 0
        %v307 = vsel %vm291, 1, 0
        %v308 = vsel %vm292, 1, 0
        %v309 = vsel %vm293, 1, 0
        %v310 = vsel %vm294, 1, 0
        %v311 = vsel %vm295, 1, 0
        %v312 = vsel %vm296, 1, 0
        %v313 = vsel %vm297, 1, 0
        %v314 = vadd.s32 %v262, %v298
        %v315 = vadd.s32 %v263, %v299
        %v316 = vadd.s32 %v264, %v300
        %v317 = vadd.s32 %v265, %v301
        %v318 = vadd.s32 %v266, %v302
        %v319 = vadd.s32 %v267, %v303
        %v320 = vadd.s32 %v268, %v304
        %v321 = vadd.s32 %v269, %v305
        %v322 = vadd.s32 %v270, %v306
        %v323 = vadd.s32 %v271, %v307
        %v324 = vadd.s32 %v272, %v308
        %v325 = vadd.s32 %v273, %v309
        %v326 = vadd.s32 %v274, %v310
        %v327 = vadd.s32 %v275, %v311
        %v328 = vadd.s32 %v276, %v312
        %v329 = vadd.s32 %v277, %v313
        %v330 = vlaneseq
        %v331 = vshrl.u32 %v330, 7
        %v332 = vsub.s32 2, %v331
        %v333 = vrot.slane %v206, %v332
        %vm334 = vcmp.eq.s32.totalorder %v333, %v226
        %vm335 = vcmp.eq.s32.totalorder %v333, %v227
        %vm336 = vcmp.eq.s32.totalorder %v333, %v228
        %vm337 = vcmp.eq.s32.totalorder %v333, %v229
        %vm338 = vcmp.eq.s32.totalorder %v333, %v230
        %vm339 = vcmp.eq.s32.totalorder %v333, %v231
        %vm340 = vcmp.eq.s32.totalorder %v333, %v232
        %vm341 = vcmp.eq.s32.totalorder %v333, %v233
        %vm342 = vcmp.eq.s32.totalorder %v333, %v234
        %vm343 = vcmp.eq.s32.totalorder %v333, %v235
        %vm344 = vcmp.eq.s32.totalorder %v333, %v236
        %vm345 = vcmp.eq.s32.totalorder %v333, %v237
        %vm346 = vcmp.eq.s32.totalorder %v333, %v238
        %vm347 = vcmp.eq.s32.totalorder %v333, %v239
        %vm348 = vcmp.eq.s32.totalorder %v333, %v240
        %vm349 = vcmp.eq.s32.totalorder %v333, %v241
        %v350 = vsel %vm334, 1, 0
        %v351 = vsel %vm335, 1, 0
        %v352 = vsel %vm336, 1, 0
        %v353 = vsel %vm337, 1, 0
        %v354 = vsel %vm338, 1, 0
        %v355 = vsel %vm339, 1, 0
        %v356 = vsel %vm340, 1, 0
        %v357 = vsel %vm341, 1, 0
        %v358 = vsel %vm342, 1, 0
        %v359 = vsel %vm343, 1, 0
        %v360 = vsel %vm344, 1, 0
        %v361 = vsel %vm345, 1, 0
        %v362 = vsel %vm346, 1, 0
        %v363 = vsel %vm347, 1, 0
        %v364 = vsel %vm348, 1, 0
        %v365 = vsel %vm349, 1, 0
        %v366 = vadd.s32 %v314, %v350
        %v367 = vadd.s32 %v315, %v351
        %v368 = vadd.s32 %v316, %v352
        %v369 = vadd.s32 %v317, %v353
        %v370 = vadd.s32 %v318, %v354
        %v371 = vadd.s32 %v319, %v355
        %v372 = vadd.s32 %v320, %v356
        %v373 = vadd.s32 %v321, %v357
        %v374 = vadd.s32 %v322, %v358
        %v375 = vadd.s32 %v323, %v359
        %v376 = vadd.s32 %v324, %v360
        %v377 = vadd.s32 %v325, %v361
        %v378 = vadd.s32 %v326, %v362
        %v379 = vadd.s32 %v327, %v363
        %v380 = vadd.s32 %v328, %v364
        %v381 = vadd.s32 %v329, %v365
        %v382 = vlaneseq
        %v383 = vshrl.u32 %v382, 7
        %v384 = vsub.s32 3, %v383
        %v385 = vrot.slane %v206, %v384
        %vm386 = vcmp.eq.s32.totalorder %v385, %v226
        %vm387 = vcmp.eq.s32.totalorder %v385, %v227
        %vm388 = vcmp.eq.s32.totalorder %v385, %v228
        %vm389 = vcmp.eq.s32.totalorder %v385, %v229
        %vm390 = vcmp.eq.s32.totalorder %v385, %v230
        %vm391 = vcmp.eq.s32.totalorder %v385, %v231
        %vm392 = vcmp.eq.s32.totalorder %v385, %v232
        %vm393 = vcmp.eq.s32.totalorder %v385, %v233
        %vm394 = vcmp.eq.s32.totalorder %v385, %v234
        %vm395 = vcmp.eq.s32.totalorder %v385, %v235
        %vm396 = vcmp.eq.s32.totalorder %v385, %v236
        %vm397 = vcmp.eq.s32.totalorder %v385, %v237
        %vm398 = vcmp.eq.s32.totalorder %v385, %v238
        %vm399 = vcmp.eq.s32.totalorder %v385, %v239
        %vm400 = vcmp.eq.s32.totalorder %v385, %v240
        %vm401 = vcmp.eq.s32.totalorder %v385, %v241
        %v402 = vsel %vm386, 1, 0
        %v403 = vsel %vm387, 1, 0
        %v404 = vsel %vm388, 1, 0
        %v405 = vsel %vm389, 1, 0
        %v406 = vsel %vm390, 1, 0
        %v407 = vsel %vm391, 1, 0
        %v408 = vsel %vm392, 1, 0
        %v409 = vsel %vm393, 1, 0
        %v410 = vsel %vm394, 1, 0
        %v411 = vsel %vm395, 1, 0
        %v412 = vsel %vm396, 1, 0
        %v413 = vsel %vm397, 1, 0
        %v414 = vsel %vm398, 1, 0
        %v415 = vsel %vm399, 1, 0
        %v416 = vsel %vm400, 1, 0
        %v417 = vsel %vm401, 1, 0
        %v418 = vadd.s32 %v366, %v402
        %v419 = vadd.s32 %v367, %v403
        %v420 = vadd.s32 %v368, %v404
        %v421 = vadd.s32 %v369, %v405
        %v422 = vadd.s32 %v370, %v406
        %v423 = vadd.s32 %v371, %v407
        %v424 = vadd.s32 %v372, %v408
        %v425 = vadd.s32 %v373, %v409
        %v426 = vadd.s32 %v374, %v410
        %v427 = vadd.s32 %v375, %v411
        %v428 = vadd.s32 %v376, %v412
        %v429 = vadd.s32 %v377, %v413
        %v430 = vadd.s32 %v378, %v414
        %v431 = vadd.s32 %v379, %v415
        %v432 = vadd.s32 %v380, %v416
        %v433 = vadd.s32 %v381, %v417
        %v434 = vcvt.s32.f32 %v418
        %v435 = vcvt.s32.f32 %v419
        %v436 = vcvt.s32.f32 %v420
        %v437 = vcvt.s32.f32 %v421
        %v438 = vcvt.s32.f32 %v422
        %v439 = vcvt.s32.f32 %v423
        %v440 = vcvt.s32.f32 %v424
        %v441 = vcvt.s32.f32 %v425
        %v442 = vcvt.s32.f32 %v426
        %v443 = vcvt.s32.f32 %v427
        %v444 = vcvt.s32.f32 %v428
        %v445 = vcvt.s32.f32 %v429
        %v446 = vcvt.s32.f32 %v430
        %v447 = vcvt.s32.f32 %v431
        %v448 = vcvt.s32.f32 %v432
        %v449 = vcvt.s32.f32 %v433
        %v450 = vld [vmem:[%s199] sm:$0xff]
        %v451 = vld [vmem:[%s199 + $0x8] sm:$0xff]
        %v452 = vld [vmem:[%s199 + $0x10] sm:$0xff]
        %v453 = vld [vmem:[%s199 + $0x18] sm:$0xff]
        %v454 = vld [vmem:[%s199 + $0x20] sm:$0xff]
        %v455 = vld [vmem:[%s199 + $0x28] sm:$0xff]
        %v456 = vld [vmem:[%s199 + $0x30] sm:$0xff]
        %v457 = vld [vmem:[%s199 + $0x38] sm:$0xff]
        %v458 = vld [vmem:[%s199 + $0x40] sm:$0xff]
        %v459 = vld [vmem:[%s199 + $0x48] sm:$0xff]
        %v460 = vld [vmem:[%s199 + $0x50] sm:$0xff]
        %v461 = vld [vmem:[%s199 + $0x58] sm:$0xff]
        %v462 = vld [vmem:[%s199 + $0x60] sm:$0xff]
        %v463 = vld [vmem:[%s199 + $0x68] sm:$0xff]
        %v464 = vld [vmem:[%s199 + $0x70] sm:$0xff]
        %v465 = vld [vmem:[%s199 + $0x78] sm:$0xff]
        %467 = vset.pattern.permute.xlu0 0
        %468 = vperm.xlu0 %467, %v450
        %v469 = vpop.permute.xlu0 %468
        %472 = vset.pattern.permute.xlu0 0
        %473 = vperm.xlu0 %472, %v451
        %v474 = vpop.permute.xlu0 %473
        %477 = vset.pattern.permute.xlu0 0
        %478 = vperm.xlu0 %477, %v452
        %v479 = vpop.permute.xlu0 %478
        %482 = vset.pattern.permute.xlu0 0
        %483 = vperm.xlu0 %482, %v453
        %v484 = vpop.permute.xlu0 %483
        %487 = vset.pattern.permute.xlu0 0
        %488 = vperm.xlu0 %487, %v454
        %v489 = vpop.permute.xlu0 %488
        %492 = vset.pattern.permute.xlu0 0
        %493 = vperm.xlu0 %492, %v455
        %v494 = vpop.permute.xlu0 %493
        %497 = vset.pattern.permute.xlu0 0
        %498 = vperm.xlu0 %497, %v456
        %v499 = vpop.permute.xlu0 %498
        %502 = vset.pattern.permute.xlu0 0
        %503 = vperm.xlu0 %502, %v457
        %v504 = vpop.permute.xlu0 %503
        %507 = vset.pattern.permute.xlu0 0
        %508 = vperm.xlu0 %507, %v458
        %v509 = vpop.permute.xlu0 %508
        %512 = vset.pattern.permute.xlu0 0
        %513 = vperm.xlu0 %512, %v459
        %v514 = vpop.permute.xlu0 %513
        %517 = vset.pattern.permute.xlu0 0
        %518 = vperm.xlu0 %517, %v460
        %v519 = vpop.permute.xlu0 %518
        %522 = vset.pattern.permute.xlu0 0
        %523 = vperm.xlu0 %522, %v461
        %v524 = vpop.permute.xlu0 %523
        %527 = vset.pattern.permute.xlu0 0
        %528 = vperm.xlu0 %527, %v462
        %v529 = vpop.permute.xlu0 %528
        %532 = vset.pattern.permute.xlu0 0
        %533 = vperm.xlu0 %532, %v463
        %v534 = vpop.permute.xlu0 %533
        %537 = vset.pattern.permute.xlu0 0
        %538 = vperm.xlu0 %537, %v464
        %v539 = vpop.permute.xlu0 %538
        %542 = vset.pattern.permute.xlu0 0
        %543 = vperm.xlu0 %542, %v465
        %v544 = vpop.permute.xlu0 %543
        %v546 = vmul.f32 %v434, %v469
        %v547 = vmul.f32 %v435, %v474
        %v548 = vmul.f32 %v436, %v479
        %v549 = vmul.f32 %v437, %v484
        %v550 = vmul.f32 %v438, %v489
        %v551 = vmul.f32 %v439, %v494
        %v552 = vmul.f32 %v440, %v499
        %v553 = vmul.f32 %v441, %v504
        %v554 = vmul.f32 %v442, %v509
        %v555 = vmul.f32 %v443, %v514
        %v556 = vmul.f32 %v444, %v519
        %v557 = vmul.f32 %v445, %v524
        %v558 = vmul.f32 %v446, %v529
        %v559 = vmul.f32 %v447, %v534
        %v560 = vmul.f32 %v448, %v539
        %v561 = vmul.f32 %v449, %v544
        %v562 = vadd.f32 %v546, %v547
        %v563 = vadd.f32 %v562, %v548
        %v564 = vadd.f32 %v563, %v549
        %v565 = vadd.f32 %v564, %v550
        %v566 = vadd.f32 %v565, %v551
        %v567 = vadd.f32 %v566, %v552
        %v568 = vadd.f32 %v567, %v553
        %v569 = vadd.f32 %v568, %v554
        %v570 = vadd.f32 %v569, %v555
        %v571 = vadd.f32 %v570, %v556
        %v572 = vadd.f32 %v571, %v557
        %v573 = vadd.f32 %v572, %v558
        %v574 = vadd.f32 %v573, %v559
        %v575 = vadd.f32 %v574, %v560
        %v576 = vadd.f32 %v575, %v561
        %v577 = vrot.slane %v576, 4
        %v578 = vadd.f32 %v576, %v577
        %v579 = vrot.slane %v578, 2
        %v580 = vadd.f32 %v578, %v579
        %v581 = vrot.slane %v580, 1
        %v582 = vadd.f32 %v580, %v581
        %v583 = vld [vmem:[#allocation2] sm:$0x1]
        %v584 = vadd.f32 %v583, %v582
        %585 = vst [vmem:[#allocation2] sm:$0x1] %v584
        %p586 = scmp.eq.s32.totalorder %s24, 2
        // Predicated region
        $region37: #{tpu_custom_call.1} parent=31 // pred_check
          %p587 = pneg %p586
        $region38: #{tpu_custom_call.1} parent=31 // pred_check_branch
          %589 = sbr.rel (%p587) target = $region40
        $region39: #{tpu_custom_call.1} parent=31 // pred_region
          %v590 = vld [vmem:[#allocation2] sm:$0x1]
          %v591 = vld [vmem:[#allocation3] sm:$0x1]
          %593 = vset.pattern.permute.xlu0 0
          %594 = vperm.xlu0 %593, %v591
          %v595 = vpop.permute.xlu0 %594
          %v597 = vlaneseq
          %v598 = vshrl.u32 %v597, 7
          %v599 = vsub.s32 0, %v598
          %v600 = vrot.slane %v595, %v599
          %v601 = vadd.f32 %v590, %v600
          %602 = vst [vmem:[%s190] sm:$0x1] %v601
        $region40: #{tpu_custom_call.1} parent=31 // pred_fallthru
          _
        %s603 = sand.u32 %s112, 1
        %s604 = scalar_lea.sflag [#allocation5], %s603
        %s605 = sand.u32 %s112, 1
        %s606 = scalar_lea.vmem [#allocation4], %s605
        // Predicated region
        $region41: #{tpu_custom_call.1} parent=31 // pred_check
          %p607 = pneg %p122
        $region42: #{tpu_custom_call.1} parent=31 // pred_check_branch
          %609 = sbr.rel (%p607) target = $region44
        $region43: #{tpu_custom_call.1} parent=31 // pred_region
          %s611 = ssub.s32 16, 16
          %612 = vsyncadd %s604, %s611
          %s613 = smul.addr %s23, 16
          %s614 = scalar_lea.hbm %s3, %s613
          %s616 = sshll.u32 %s606, 4
          %s617 = int_to_ptr.vmem [resolvable:$true] %s616
          %619 = dma.vmem_to_hbm [thread:$0]  %s617, 16, %s614, %s604
        $region44: #{tpu_custom_call.1} parent=31 // pred_fallthru
          _
      $region32: #{tpu_custom_call.1} parent=5 // pred_fallthru
        _
      %p620 = scmp.le.s32.totalorder 2, %s14
      // Predicated region
      $region45: #{tpu_custom_call.1} parent=5 // pred_check
        %p621 = pneg %p620
      $region46: #{tpu_custom_call.1} parent=5 // pred_check_branch
        %623 = sbr.rel (%p621) target = $region48
      $region47: #{tpu_custom_call.1} parent=5 // pred_region
        %s624 = ssub.s32 %s14, 2
        // Predicated region
        $region49: #{tpu_custom_call.1} parent=47 // pred_check
          %p625 = pneg %p128
        $region50: #{tpu_custom_call.1} parent=47 // pred_check_branch
          %627 = sbr.rel (%p625) target = $region52
        $region51: #{tpu_custom_call.1} parent=47 // pred_region
          %s628 = sand.u32 %s113, 1
          %s629 = scalar_lea.sflag [#allocation5], %s628
          %s630 = sand.u32 %s113, 1
          %s631 = scalar_lea.vmem [#allocation4], %s630
          %632 = dma.done %s629, 16
        $region52: #{tpu_custom_call.1} parent=47 // pred_fallthru
          _
      $region48: #{tpu_custom_call.1} parent=5 // pred_fallthru
        _
    $region6: #{tpu_custom_call.1} parent=1 // loop_footer
      %s18 = sadd.s32 1, %s14
    $region7: #{tpu_custom_call.1} parent=1 // loop_footer_branch
      %13 = sbr.rel target = $region3
    $region8: #{tpu_custom_call.1} parent=1 // loop_exit
      _
    %633 = vsyncpa [#allocation5], 1
    %s634 = scalar_lea.sflag [#allocation5], 1
    %635 = vsyncpa %s634, 1

</llo_original>
